<compile_context>
chip_gen: v7x
topology: tpu7x:2x2x1
jax: 0.10.0
libtpu: 0.0.40
codegen_flags: <defaults>
</compile_context>

<pallas_src>
import jax
import jax.numpy as jnp
from jax.experimental import pallas as pl
from jax.experimental.pallas import tpu as pltpu


_LANE = 128
_SUBLANE = 8


def _round_up(x, m):
    return ((x + m - 1) // m) * m


def _vmem_limit_bytes():
    """Generation-aware scoped-VMEM limit (~5/8 of physical, capped)."""
    cap = 64 * 1024 * 1024          # conservative default (v7x per-TC VMEM)
    try:
        cap = int(pltpu.get_tpu_info().vmem_capacity_bytes)
    except Exception:
        pass
    return int(min(cap * 5 // 8, 96 * 1024 * 1024))


def _choose_rows_per_block(num_classes, padded_rows, x_itemsize, lab_itemsize,
                           vmem_limit):
    """Rows per grid step: as big as fits ~half the VMEM budget, <= 1024."""
    # double-buffered logits + labels blocks plus ~4 live f32 temporaries
    per_row = _LANE * (2 * num_classes * x_itemsize + 2 * lab_itemsize
                       + 4 * num_classes * 4)
    rows_cap = (vmem_limit // 2) // per_row
    rows_cap = max(_SUBLANE, min(1024, (rows_cap // _SUBLANE) * _SUBLANE))
    return min(rows_cap, padded_rows)


def _make_dice_kernel(num_classes, r_tile, n_hw_inner, n_row_blocks,
                      full_valid_rows, n_split):
    sub = r_tile // _SUBLANE
    # Static facts about this launch (decided at trace time):
    mask_possible = full_valid_rows < n_row_blocks * r_tile
    needs_skip = n_split * n_hw_inner > n_row_blocks

    def kernel(x_ref, lab_ref, out_ref):
        # x_ref:   (1, C, r_tile, 128)   logits tile, native dtype
        # lab_ref: (1, r_tile, 128)      class labels (padding marked with C)
        # out_ref: (1, 3*C, 8, 128)      f32 accumulator, resident across axis 2
        s = pl.program_id(1)
        h = pl.program_id(2)
        row_blk = s * n_hw_inner + h

        @pl.when(h == 0)
        def _init():
            out_ref[...] = jnp.zeros_like(out_ref)

        def contribution(masked):
            x = x_ref[0]                                  # (C, R, 128) native
            lab = lab_ref[0].astype(jnp.int32)            # (R, 128)

            # Channel softmax: reductions over the leading C axis are plain
            # elementwise VPU max/adds across lane-dense slabs; exp/recip on EUP.
            m = jnp.max(x, axis=0, keepdims=True)
            e = jnp.exp((x - m).astype(jnp.float32))
            p = e * pl.reciprocal(jnp.sum(e, axis=0, keepdims=True), approx=True)

            # Group rows into whole (8,128) vreg tiles so all reductions below
            # are vreg-wise VPU adds (no per-step cross-lane XLU reductions).
            p4 = p.reshape(num_classes, sub, _SUBLANE, _LANE)
            lab4 = lab.reshape(sub, _SUBLANE, _LANE)
            valid = (lab4 < num_classes) if masked else None

            inter, psum, tsum = [], [], []
            for c in range(num_classes):
                mc = lab4 == c
                pc = p4[c]
                # NaN-safe selects: garbage/padded columns never reach the sums.
                inter.append(jnp.sum(jnp.where(mc, pc, 0.0), axis=0))
                psum.append(jnp.sum(jnp.where(valid, pc, 0.0) if masked else pc,
                                    axis=0))
                tsum.append(jnp.sum(jnp.where(mc, 1.0, 0.0), axis=0))
            # One fused lane-dense accumulator update.
            return jnp.stack(inter + psum + tsum, axis=0)   # (3C, 8, 128)

        def accumulate(masked):
            out_ref[0] = out_ref[0] + contribution(masked)

        in_range = row_blk < n_row_blocks
        if mask_possible:
            boundary = (row_blk + 1) * r_tile > full_valid_rows
            interior = jnp.logical_not(boundary)
            if needs_skip:
                interior = jnp.logical_and(in_range, interior)
                boundary = jnp.logical_and(in_range, boundary)

            @pl.when(interior)
            def _interior():          # mask-free fast path
                accumulate(False)

            @pl.when(boundary)
            def _boundary():          # ragged tail / padded pixels
                accumulate(True)
        else:
            if needs_skip:
                @pl.when(in_range)
                def _acc():
                    accumulate(False)
            else:
                accumulate(False)

    return kernel


def dice_loss(logits, labels, eps=1e-9, block_rows=None):
    """Dice loss from NCHW logits and integer class labels (B, H, W)."""
    B, C, H, W = logits.shape
    HW = H * W
    hw_rows = pl.cdiv(HW, _LANE)
    padded_rows = _round_up(max(hw_rows, _SUBLANE), _SUBLANE)
    hw_padded = padded_rows * _LANE
    full_valid_rows = HW // _LANE        # rows with no lane padding

    x = logits.reshape(B, C, HW)         # native dtype (f32 or bf16)
    if hw_padded != HW:
        # Only when HW % 1024 != 0 (e.g. tiny images); otherwise no copy.
        x = jnp.pad(x, ((0, 0), (0, 0), (0, hw_padded - HW)))
    x = x.reshape(B, C, padded_rows, _LANE)

    vmem_limit = _vmem_limit_bytes()
    # Narrow label dtype when int8 row tiles stay (32,128)-aligned.
    r_tile = _choose_rows_per_block(C, padded_rows, x.dtype.itemsize, 1,
                                    vmem_limit)
    if block_rows is not None:
        r_tile = max(_SUBLANE, min(r_tile, (block_rows // _SUBLANE) * _SUBLANE))
    lab_dtype = jnp.int8 if (C <= 127 and r_tile % 32 == 0) else jnp.int32

    n_row_blocks = pl.cdiv(padded_rows, r_tile)
    # Feed both v7x TensorCores when the batch alone cannot (no-op on 1-TC chips).
    n_split = 2 if (B % 2 == 1 and n_row_blocks >= 2) else 1
    n_hw_inner = pl.cdiv(n_row_blocks, n_split)
    needs_skip = n_split * n_hw_inner > n_row_blocks

    label_rows = n_row_blocks * r_tile
    lab = labels.reshape(B, HW).astype(lab_dtype)
    # Out-of-range class id C marks padded pixels; the kernel masks them out.
    lab = jnp.pad(lab, ((0, 0), (0, label_rows * _LANE - HW)), constant_values=C)
    lab = lab.reshape(B, label_rows, _LANE)

    last_blk = n_row_blocks - 1
    if needs_skip:
        def _blk(s, h):
            # Clamp duplicate/OOB steps onto the last valid block; the kernel
            # skips their accumulation via pl.when(row_blk < n_row_blocks).
            return jnp.minimum(s * n_hw_inner + h, last_blk)
    else:
        def _blk(s, h):
            return s * n_hw_inner + h

    kernel = _make_dice_kernel(C, r_tile, n_hw_inner, n_row_blocks,
                               full_valid_rows, n_split)

    sums = pl.pallas_call(
        kernel,
        out_shape=jax.ShapeDtypeStruct((B * n_split, 3 * C, _SUBLANE, _LANE),
                                       jnp.float32),
        grid_spec=pltpu.PrefetchScalarGridSpec(
            num_scalar_prefetch=0,
            grid=(B, n_split, n_hw_inner),           # reduction (HW) axis last
            in_specs=[
                pl.BlockSpec((1, C, r_tile, _LANE),
                             lambda b, s, h: (b, 0, _blk(s, h), 0)),
                pl.BlockSpec((1, r_tile, _LANE),
                             lambda b, s, h: (b, _blk(s, h), 0)),
            ],
            out_specs=pl.BlockSpec((1, 3 * C, _SUBLANE, _LANE),
                                   lambda b, s, h: (b * n_split + s, 0, 0, 0)),
        ),
        compiler_params=pltpu.CompilerParams(
            dimension_semantics=("parallel", "parallel", "arbitrary"),
            vmem_limit_bytes=vmem_limit,
        ),
    )(x, lab)

    # Final tiny reductions in plain JAX: split halves + (8,128) lane tile.
    sums = sums.reshape(B, n_split, 3, C, _SUBLANE, _LANE).sum(axis=(1, 4, 5))
    inter, psum, tsum = sums[:, 0], sums[:, 1], sums[:, 2]
    dice_bc = (2.0 * inter + eps) / (psum + tsum + eps)    # (B, C)
    dice_per_channel = jnp.mean(dice_bc, axis=0)           # reduction='mean'
    return 1.0 - jnp.mean(dice_per_channel)                # mean over channels


def dice_loss_from_onehot(logits, onehot_target, eps=1e-9, block_rows=None):
    """Compatibility wrapper matching the original module signature (NCHW
    one-hot target).  Note: pixels whose one-hot row is all zeros become
    class 0 via argmax (differs from the one-hot path for ignore regions)."""
    labels = jnp.argmax(onehot_target, axis=1)
    return dice_loss(logits, labels, eps=eps, block_rows=block_rows)


def _dice_loss_ref(logits, onehot_target, eps=1e-9):
    # pure-JAX reference for sanity checking
    p = jax.nn.softmax(logits.astype(jnp.float32), axis=1)
    t = onehot_target.astype(jnp.float32)
    inter = jnp.sum(p * t, axis=(2, 3))
    psum = jnp.sum(p, axis=(2, 3))
    tsum = jnp.sum(t, axis=(2, 3))
    dice = (2.0 * inter + eps) / (psum + tsum + eps)
    return 1.0 - jnp.mean(jnp.mean(dice, axis=0))


if __name__ == "__main__":
    root = jax.random.PRNGKey(0)

    def run_case(case_id, B, C, H, W, block_rows=None):
        k1, k2 = jax.random.split(jax.random.fold_in(root, case_id))
        logits = jax.random.normal(k1, (B, C, H, W), dtype=jnp.float32)
        labels = jax.random.randint(k2, (B, H, W), 0, C)
        onehot = jax.nn.one_hot(labels, C, axis=1, dtype=jnp.float32)  # NCHW

        loss = jax.block_until_ready(dice_loss(logits, labels,
                                               block_rows=block_rows))
        ref = jax.block_until_ready(_dice_loss_ref(logits, onehot))
        # approx=True reciprocal -> ~1e-4 relative error on the softmax.
        assert jnp.allclose(loss, ref, atol=1e-3, rtol=1e-3), (case_id, loss, ref)
        return loss, ref

    # Masked boundary path, int32 labels, single row-block.
    run_case(1, B=2, C=4, H=16, W=16)
    # Mask-free interior path, int8 labels (r_tile = 32), single row-block.
    run_case(2, B=2, C=4, H=64, W=64)
    # Odd batch -> 2-way parallel spatial split, even block count, no masking.
    run_case(3, B=1, C=4, H=64, W=64, block_rows=8)
    # Odd batch + odd block count -> split with clamped/skipped step + masking.
    run_case(4, B=1, C=3, H=80, W=80, block_rows=8)

    # One-hot compatibility wrapper.
    kk1, kk2 = jax.random.split(jax.random.fold_in(root, 5))
    logits = jax.random.normal(kk1, (2, 4, 16, 16), dtype=jnp.float32)
    labels = jax.random.randint(kk2, (2, 16, 16), 0, 4)
    onehot = jax.nn.one_hot(labels, 4, axis=1, dtype=jnp.float32)
    loss_oh = jax.block_until_ready(dice_loss_from_onehot(logits, onehot))
    ref = jax.block_until_ready(_dice_loss_ref(logits, onehot))
    assert jnp.allclose(loss_oh, ref, atol=1e-3, rtol=1e-3), (loss_oh, ref)

    print("KERNEL_OK")
</pallas_src>

<mosaic_0001>
module attributes {stable_mosaic.version = 11 : i64} {
  func.func @kernel(%arg0: i32, %arg1: i32, %arg2: i32, %arg3: memref<1x4x8x128xf32, #tpu.memory_space<vmem>>, %arg4: memref<1x8x128xi32, #tpu.memory_space<vmem>>, %arg5: memref<1x12x8x128xf32, #tpu.memory_space<vmem>>) attributes {dimension_semantics = [#tpu.dimension_semantics<parallel>, #tpu.dimension_semantics<parallel>, #tpu.dimension_semantics<arbitrary>], iteration_bounds = array<i64: 2, 1, 1>, scalar_prefetch = 0 : i64, scratch_operands = 0 : i64, tpu.core_type = #tpu.core_type<tc>, window_params = [{transform_indices = @transform_0, window_bounds = array<i64: 1, 4, 8, 128>}, {transform_indices = @transform_1, window_bounds = array<i64: 1, 8, 128>}, {transform_indices = @transform_2, window_bounds = array<i64: 1, 12, 8, 128>}]} {
    %c1_i32 = arith.constant 1 : i32
    %0 = arith.muli %arg1, %c1_i32 : i32
    %1 = arith.addi %0, %arg2 : i32
    %c0_i32 = arith.constant 0 : i32
    %2 = arith.cmpi eq, %arg2, %c0_i32 : i32
    %3 = arith.extui %2 : i1 to i32
    %c0_i32_0 = arith.constant 0 : i32
    %4 = arith.cmpi ne, %3, %c0_i32_0 : i32
    scf.if %4 {
      %cst = arith.constant 0.000000e+00 : f32
      %13 = vector.broadcast %cst : f32 to vector<1x12x8x128xf32>
      %c0 = arith.constant 0 : index
      %c0_4 = arith.constant 0 : index
      %c0_5 = arith.constant 0 : index
      %c0_6 = arith.constant 0 : index
      %14 = vector.load %arg5[%c0, %c0_4, %c0_5, %c0_6] : memref<1x12x8x128xf32, #tpu.memory_space<vmem>>, vector<1x12x8x128xf32>
      tpu.vector_store %arg5[%c0, %c0_4, %c0_5, %c0_6], %13 {strides = array<i32>} : memref<1x12x8x128xf32, #tpu.memory_space<vmem>>, vector<1x12x8x128xf32>,
    } else {
    }
    %c1_i32_1 = arith.constant 1 : i32
    %5 = arith.addi %1, %c1_i32_1 : i32
    %c8_i32 = arith.constant 8 : i32
    %6 = arith.muli %5, %c8_i32 : i32
    %c2_i32 = arith.constant 2 : i32
    %7 = arith.cmpi sgt, %6, %c2_i32 : i32
    %true = arith.constant true
    %8 = arith.xori %7, %true : i1
    %9 = arith.extui %8 : i1 to i32
    %c0_i32_2 = arith.constant 0 : i32
    %10 = arith.cmpi ne, %9, %c0_i32_2 : i32
    scf.if %10 {
      %c0 = arith.constant 0 : index
      %c0_4 = arith.constant 0 : index
      %c0_5 = arith.constant 0 : index
      %c0_6 = arith.constant 0 : index
      %13 = vector.load %arg5[%c0, %c0_4, %c0_5, %c0_6] : memref<1x12x8x128xf32, #tpu.memory_space<vmem>>, vector<1x12x8x128xf32>
      %14 = vector.shape_cast %13 : vector<1x12x8x128xf32> to vector<12x8x128xf32>
      %c0_7 = arith.constant 0 : index
      %c0_8 = arith.constant 0 : index
      %c0_9 = arith.constant 0 : index
      %c0_10 = arith.constant 0 : index
      %15 = vector.load %arg3[%c0_7, %c0_8, %c0_9, %c0_10] : memref<1x4x8x128xf32, #tpu.memory_space<vmem>>, vector<1x4x8x128xf32>
      %16 = vector.shape_cast %15 : vector<1x4x8x128xf32> to vector<4x8x128xf32>
      %c0_11 = arith.constant 0 : index
      %c0_12 = arith.constant 0 : index
      %c0_13 = arith.constant 0 : index
      %17 = vector.load %arg4[%c0_11, %c0_12, %c0_13] : memref<1x8x128xi32, #tpu.memory_space<vmem>>, vector<1x8x128xi32>
      %18 = vector.shape_cast %17 : vector<1x8x128xi32> to vector<8x128xi32>
      %cst = arith.constant dense<0xFF800000> : vector<8x128xf32>
      %19 = vector.multi_reduction <maximumf>, %16, %cst [0] : vector<4x8x128xf32> to vector<8x128xf32>
      %20 = vector.shape_cast %19 : vector<8x128xf32> to vector<1x8x128xf32>
      %21 = vector.broadcast %20 : vector<1x8x128xf32> to vector<4x8x128xf32>
      %22 = arith.subf %16, %21 : vector<4x8x128xf32>
      %23 = math.exp %22 : vector<4x8x128xf32>
      %cst_14 = arith.constant dense<0.000000e+00> : vector<8x128xf32>
      %24 = vector.multi_reduction <add>, %23, %cst_14 [0] : vector<4x8x128xf32> to vector<8x128xf32>
      %25 = vector.shape_cast %24 : vector<8x128xf32> to vector<1x8x128xf32>
      %26 = tpu.reciprocal %25 {approx = true} : vector<1x8x128xf32> -> vector<1x8x128xf32>
      %27 = vector.broadcast %26 : vector<1x8x128xf32> to vector<4x8x128xf32>
      %28 = arith.mulf %23, %27 : vector<4x8x128xf32>
      %29 = vector.shape_cast %28 : vector<4x8x128xf32> to vector<4x1x8x128xf32>
      %30 = vector.shape_cast %18 : vector<8x128xi32> to vector<1x8x128xi32>
      %c0_i32_15 = arith.constant 0 : i32
      %31 = vector.broadcast %c0_i32_15 : i32 to vector<1x8x128xi32>
      %32 = arith.cmpi eq, %30, %31 : vector<1x8x128xi32>
      %33 = vector.extract_strided_slice %29 {offsets = [0, 0, 0, 0], sizes = [1, 1, 8, 128], strides = [1, 1, 1, 1]} : vector<4x1x8x128xf32> to vector<1x1x8x128xf32>
      %34 = vector.shape_cast %33 : vector<1x1x8x128xf32> to vector<1x8x128xf32>
      %cst_16 = arith.constant 0.000000e+00 : f32
      %35 = vector.broadcast %cst_16 : f32 to vector<1x8x128xf32>
      %36 = arith.select %32, %34, %35 : vector<1x8x128xi1>, vector<1x8x128xf32>
      %cst_17 = arith.constant dense<0.000000e+00> : vector<8x128xf32>
      %37 = vector.multi_reduction <add>, %36, %cst_17 [0] : vector<1x8x128xf32> to vector<8x128xf32>
      %cst_18 = arith.constant dense<0.000000e+00> : vector<8x128xf32>
      %38 = vector.multi_reduction <add>, %34, %cst_18 [0] : vector<1x8x128xf32> to vector<8x128xf32>
      %cst_19 = arith.constant 1.000000e+00 : f32
      %cst_20 = arith.constant 0.000000e+00 : f32
      %39 = vector.broadcast %cst_19 : f32 to vector<1x8x128xf32>
      %40 = vector.broadcast %cst_20 : f32 to vector<1x8x128xf32>
      %41 = arith.select %32, %39, %40 : vector<1x8x128xi1>, vector<1x8x128xf32>
      %cst_21 = arith.constant dense<0.000000e+00> : vector<8x128xf32>
      %42 = vector.multi_reduction <add>, %41, %cst_21 [0] : vector<1x8x128xf32> to vector<8x128xf32>
      %c1_i32_22 = arith.constant 1 : i32
      %43 = vector.broadcast %c1_i32_22 : i32 to vector<1x8x128xi32>
      %44 = arith.cmpi eq, %30, %43 : vector<1x8x128xi32>
      %45 = vector.extract_strided_slice %29 {offsets = [1, 0, 0, 0], sizes = [1, 1, 8, 128], strides = [1, 1, 1, 1]} : vector<4x1x8x128xf32> to vector<1x1x8x128xf32>
      %46 = vector.shape_cast %45 : vector<1x1x8x128xf32> to vector<1x8x128xf32>
      %cst_23 = arith.constant 0.000000e+00 : f32
      %47 = vector.broadcast %cst_23 : f32 to vector<1x8x128xf32>
      %48 = arith.select %44, %46, %47 : vector<1x8x128xi1>, vector<1x8x128xf32>
      %cst_24 = arith.constant dense<0.000000e+00> : vector<8x128xf32>
      %49 = vector.multi_reduction <add>, %48, %cst_24 [0] : vector<1x8x128xf32> to vector<8x128xf32>
      %cst_25 = arith.constant dense<0.000000e+00> : vector<8x128xf32>
      %50 = vector.multi_reduction <add>, %46, %cst_25 [0] : vector<1x8x128xf32> to vector<8x128xf32>
      %cst_26 = arith.constant 1.000000e+00 : f32
      %cst_27 = arith.constant 0.000000e+00 : f32
      %51 = vector.broadcast %cst_26 : f32 to vector<1x8x128xf32>
      %52 = vector.broadcast %cst_27 : f32 to vector<1x8x128xf32>
      %53 = arith.select %44, %51, %52 : vector<1x8x128xi1>, vector<1x8x128xf32>
      %cst_28 = arith.constant dense<0.000000e+00> : vector<8x128xf32>
      %54 = vector.multi_reduction <add>, %53, %cst_28 [0] : vector<1x8x128xf32> to vector<8x128xf32>
      %c2_i32_29 = arith.constant 2 : i32
      %55 = vector.broadcast %c2_i32_29 : i32 to vector<1x8x128xi32>
      %56 = arith.cmpi eq, %30, %55 : vector<1x8x128xi32>
      %57 = vector.extract_strided_slice %29 {offsets = [2, 0, 0, 0], sizes = [1, 1, 8, 128], strides = [1, 1, 1, 1]} : vector<4x1x8x128xf32> to vector<1x1x8x128xf32>
      %58 = vector.shape_cast %57 : vector<1x1x8x128xf32> to vector<1x8x128xf32>
      %cst_30 = arith.constant 0.000000e+00 : f32
      %59 = vector.broadcast %cst_30 : f32 to vector<1x8x128xf32>
      %60 = arith.select %56, %58, %59 : vector<1x8x128xi1>, vector<1x8x128xf32>
      %cst_31 = arith.constant dense<0.000000e+00> : vector<8x128xf32>
      %61 = vector.multi_reduction <add>, %60, %cst_31 [0] : vector<1x8x128xf32> to vector<8x128xf32>
      %cst_32 = arith.constant dense<0.000000e+00> : vector<8x128xf32>
      %62 = vector.multi_reduction <add>, %58, %cst_32 [0] : vector<1x8x128xf32> to vector<8x128xf32>
      %cst_33 = arith.constant 1.000000e+00 : f32
      %cst_34 = arith.constant 0.000000e+00 : f32
      %63 = vector.broadcast %cst_33 : f32 to vector<1x8x128xf32>
      %64 = vector.broadcast %cst_34 : f32 to vector<1x8x128xf32>
      %65 = arith.select %56, %63, %64 : vector<1x8x128xi1>, vector<1x8x128xf32>
      %cst_35 = arith.constant dense<0.000000e+00> : vector<8x128xf32>
      %66 = vector.multi_reduction <add>, %65, %cst_35 [0] : vector<1x8x128xf32> to vector<8x128xf32>
      %c3_i32 = arith.constant 3 : i32
      %67 = vector.broadcast %c3_i32 : i32 to vector<1x8x128xi32>
      %68 = arith.cmpi eq, %30, %67 : vector<1x8x128xi32>
      %69 = vector.extract_strided_slice %29 {offsets = [3, 0, 0, 0], sizes = [1, 1, 8, 128], strides = [1, 1, 1, 1]} : vector<4x1x8x128xf32> to vector<1x1x8x128xf32>
      %70 = vector.shape_cast %69 : vector<1x1x8x128xf32> to vector<1x8x128xf32>
      %cst_36 = arith.constant 0.000000e+00 : f32
      %71 = vector.broadcast %cst_36 : f32 to vector<1x8x128xf32>
      %72 = arith.select %68, %70, %71 : vector<1x8x128xi1>, vector<1x8x128xf32>
      %cst_37 = arith.constant dense<0.000000e+00> : vector<8x128xf32>
      %73 = vector.multi_reduction <add>, %72, %cst_37 [0] : vector<1x8x128xf32> to vector<8x128xf32>
      %cst_38 = arith.constant dense<0.000000e+00> : vector<8x128xf32>
      %74 = vector.multi_reduction <add>, %70, %cst_38 [0] : vector<1x8x128xf32> to vector<8x128xf32>
      %cst_39 = arith.constant 1.000000e+00 : f32
      %cst_40 = arith.constant 0.000000e+00 : f32
      %75 = vector.broadcast %cst_39 : f32 to vector<1x8x128xf32>
      %76 = vector.broadcast %cst_40 : f32 to vector<1x8x128xf32>
      %77 = arith.select %68, %75, %76 : vector<1x8x128xi1>, vector<1x8x128xf32>
      %cst_41 = arith.constant dense<0.000000e+00> : vector<8x128xf32>
      %78 = vector.multi_reduction <add>, %77, %cst_41 [0] : vector<1x8x128xf32> to vector<8x128xf32>
      %79 = vector.shape_cast %37 : vector<8x128xf32> to vector<1x8x128xf32>
      %80 = vector.shape_cast %49 : vector<8x128xf32> to vector<1x8x128xf32>
      %81 = vector.shape_cast %61 : vector<8x128xf32> to vector<1x8x128xf32>
      %82 = vector.shape_cast %73 : vector<8x128xf32> to vector<1x8x128xf32>
      %83 = vector.shape_cast %38 : vector<8x128xf32> to vector<1x8x128xf32>
      %84 = vector.shape_cast %50 : vector<8x128xf32> to vector<1x8x128xf32>
      %85 = vector.shape_cast %62 : vector<8x128xf32> to vector<1x8x128xf32>
      %86 = vector.shape_cast %74 : vector<8x128xf32> to vector<1x8x128xf32>
      %87 = vector.shape_cast %42 : vector<8x128xf32> to vector<1x8x128xf32>
      %88 = vector.shape_cast %54 : vector<8x128xf32> to vector<1x8x128xf32>
      %89 = vector.shape_cast %66 : vector<8x128xf32> to vector<1x8x128xf32>
      %90 = vector.shape_cast %78 : vector<8x128xf32> to vector<1x8x128xf32>
      %91 = tpu.concatenate %79, %80, %81, %82, %83, %84, %85, %86, %87, %88, %89, %90 in 0 : vector<1x8x128xf32>, vector<1x8x128xf32>, vector<1x8x128xf32>, vector<1x8x128xf32>, vector<1x8x128xf32>, vector<1x8x128xf32>, vector<1x8x128xf32>, vector<1x8x128xf32>, vector<1x8x128xf32>, vector<1x8x128xf32>, vector<1x8x128xf32>, vector<1x8x128xf32> -> vector<12x8x128xf32>
      %92 = arith.addf %14, %91 : vector<12x8x128xf32>
      %c0_42 = arith.constant 0 : index
      %c0_43 = arith.constant 0 : index
      %c0_44 = arith.constant 0 : index
      %c0_45 = arith.constant 0 : index
      %93 = vector.load %arg5[%c0_42, %c0_43, %c0_44, %c0_45] : memref<1x12x8x128xf32, #tpu.memory_space<vmem>>, vector<1x12x8x128xf32>
      %94 = vector.shape_cast %93 : vector<1x12x8x128xf32> to vector<12x8x128xf32>
      %95 = vector.shape_cast %92 : vector<12x8x128xf32> to vector<1x12x8x128xf32>
      tpu.vector_store %arg5[%c0_42, %c0_43, %c0_44, %c0_45], %95 {strides = array<i32>} : memref<1x12x8x128xf32, #tpu.memory_space<vmem>>, vector<1x12x8x128xf32>,
    } else {
    }
    %11 = arith.extui %7 : i1 to i32
    %c0_i32_3 = arith.constant 0 : i32
    %12 = arith.cmpi ne, %11, %c0_i32_3 : i32
    scf.if %12 {
      %c0 = arith.constant 0 : index
      %c0_4 = arith.constant 0 : index
      %c0_5 = arith.constant 0 : index
      %c0_6 = arith.constant 0 : index
      %13 = vector.load %arg5[%c0, %c0_4, %c0_5, %c0_6] : memref<1x12x8x128xf32, #tpu.memory_space<vmem>>, vector<1x12x8x128xf32>
      %14 = vector.shape_cast %13 : vector<1x12x8x128xf32> to vector<12x8x128xf32>
      %c0_7 = arith.constant 0 : index
      %c0_8 = arith.constant 0 : index
      %c0_9 = arith.constant 0 : index
      %c0_10 = arith.constant 0 : index
      %15 = vector.load %arg3[%c0_7, %c0_8, %c0_9, %c0_10] : memref<1x4x8x128xf32, #tpu.memory_space<vmem>>, vector<1x4x8x128xf32>
      %16 = vector.shape_cast %15 : vector<1x4x8x128xf32> to vector<4x8x128xf32>
      %c0_11 = arith.constant 0 : index
      %c0_12 = arith.constant 0 : index
      %c0_13 = arith.constant 0 : index
      %17 = vector.load %arg4[%c0_11, %c0_12, %c0_13] : memref<1x8x128xi32, #tpu.memory_space<vmem>>, vector<1x8x128xi32>
      %18 = vector.shape_cast %17 : vector<1x8x128xi32> to vector<8x128xi32>
      %cst = arith.constant dense<0xFF800000> : vector<8x128xf32>
      %19 = vector.multi_reduction <maximumf>, %16, %cst [0] : vector<4x8x128xf32> to vector<8x128xf32>
      %20 = vector.shape_cast %19 : vector<8x128xf32> to vector<1x8x128xf32>
      %21 = vector.broadcast %20 : vector<1x8x128xf32> to vector<4x8x128xf32>
      %22 = arith.subf %16, %21 : vector<4x8x128xf32>
      %23 = math.exp %22 : vector<4x8x128xf32>
      %cst_14 = arith.constant dense<0.000000e+00> : vector<8x128xf32>
      %24 = vector.multi_reduction <add>, %23, %cst_14 [0] : vector<4x8x128xf32> to vector<8x128xf32>
      %25 = vector.shape_cast %24 : vector<8x128xf32> to vector<1x8x128xf32>
      %26 = tpu.reciprocal %25 {approx = true} : vector<1x8x128xf32> -> vector<1x8x128xf32>
      %27 = vector.broadcast %26 : vector<1x8x128xf32> to vector<4x8x128xf32>
      %28 = arith.mulf %23, %27 : vector<4x8x128xf32>
      %29 = vector.shape_cast %28 : vector<4x8x128xf32> to vector<4x1x8x128xf32>
      %30 = vector.shape_cast %18 : vector<8x128xi32> to vector<1x8x128xi32>
      %c4_i32 = arith.constant 4 : i32
      %31 = vector.broadcast %c4_i32 : i32 to vector<1x8x128xi32>
      %32 = arith.cmpi slt, %30, %31 : vector<1x8x128xi32>
      %c0_i32_15 = arith.constant 0 : i32
      %33 = vector.broadcast %c0_i32_15 : i32 to vector<1x8x128xi32>
      %34 = arith.cmpi eq, %30, %33 : vector<1x8x128xi32>
      %35 = vector.extract_strided_slice %29 {offsets = [0, 0, 0, 0], sizes = [1, 1, 8, 128], strides = [1, 1, 1, 1]} : vector<4x1x8x128xf32> to vector<1x1x8x128xf32>
      %36 = vector.shape_cast %35 : vector<1x1x8x128xf32> to vector<1x8x128xf32>
      %cst_16 = arith.constant 0.000000e+00 : f32
      %37 = vector.broadcast %cst_16 : f32 to vector<1x8x128xf32>
      %38 = arith.select %34, %36, %37 : vector<1x8x128xi1>, vector<1x8x128xf32>
      %cst_17 = arith.constant dense<0.000000e+00> : vector<8x128xf32>
      %39 = vector.multi_reduction <add>, %38, %cst_17 [0] : vector<1x8x128xf32> to vector<8x128xf32>
      %cst_18 = arith.constant 0.000000e+00 : f32
      %40 = vector.broadcast %cst_18 : f32 to vector<1x8x128xf32>
      %41 = arith.select %32, %36, %40 : vector<1x8x128xi1>, vector<1x8x128xf32>
      %cst_19 = arith.constant dense<0.000000e+00> : vector<8x128xf32>
      %42 = vector.multi_reduction <add>, %41, %cst_19 [0] : vector<1x8x128xf32> to vector<8x128xf32>
      %cst_20 = arith.constant 1.000000e+00 : f32
      %cst_21 = arith.constant 0.000000e+00 : f32
      %43 = vector.broadcast %cst_20 : f32 to vector<1x8x128xf32>
      %44 = vector.broadcast %cst_21 : f32 to vector<1x8x128xf32>
      %45 = arith.select %34, %43, %44 : vector<1x8x128xi1>, vector<1x8x128xf32>
      %cst_22 = arith.constant dense<0.000000e+00> : vector<8x128xf32>
      %46 = vector.multi_reduction <add>, %45, %cst_22 [0] : vector<1x8x128xf32> to vector<8x128xf32>
      %c1_i32_23 = arith.constant 1 : i32
      %47 = vector.broadcast %c1_i32_23 : i32 to vector<1x8x128xi32>
      %48 = arith.cmpi eq, %30, %47 : vector<1x8x128xi32>
      %49 = vector.extract_strided_slice %29 {offsets = [1, 0, 0, 0], sizes = [1, 1, 8, 128], strides = [1, 1, 1, 1]} : vector<4x1x8x128xf32> to vector<1x1x8x128xf32>
      %50 = vector.shape_cast %49 : vector<1x1x8x128xf32> to vector<1x8x128xf32>
      %cst_24 = arith.constant 0.000000e+00 : f32
      %51 = vector.broadcast %cst_24 : f32 to vector<1x8x128xf32>
      %52 = arith.select %48, %50, %51 : vector<1x8x128xi1>, vector<1x8x128xf32>
      %cst_25 = arith.constant dense<0.000000e+00> : vector<8x128xf32>
      %53 = vector.multi_reduction <add>, %52, %cst_25 [0] : vector<1x8x128xf32> to vector<8x128xf32>
      %cst_26 = arith.constant 0.000000e+00 : f32
      %54 = vector.broadcast %cst_26 : f32 to vector<1x8x128xf32>
      %55 = arith.select %32, %50, %54 : vector<1x8x128xi1>, vector<1x8x128xf32>
      %cst_27 = arith.constant dense<0.000000e+00> : vector<8x128xf32>
      %56 = vector.multi_reduction <add>, %55, %cst_27 [0] : vector<1x8x128xf32> to vector<8x128xf32>
      %cst_28 = arith.constant 1.000000e+00 : f32
      %cst_29 = arith.constant 0.000000e+00 : f32
      %57 = vector.broadcast %cst_28 : f32 to vector<1x8x128xf32>
      %58 = vector.broadcast %cst_29 : f32 to vector<1x8x128xf32>
      %59 = arith.select %48, %57, %58 : vector<1x8x128xi1>, vector<1x8x128xf32>
      %cst_30 = arith.constant dense<0.000000e+00> : vector<8x128xf32>
      %60 = vector.multi_reduction <add>, %59, %cst_30 [0] : vector<1x8x128xf32> to vector<8x128xf32>
      %c2_i32_31 = arith.constant 2 : i32
      %61 = vector.broadcast %c2_i32_31 : i32 to vector<1x8x128xi32>
      %62 = arith.cmpi eq, %30, %61 : vector<1x8x128xi32>
      %63 = vector.extract_strided_slice %29 {offsets = [2, 0, 0, 0], sizes = [1, 1, 8, 128], strides = [1, 1, 1, 1]} : vector<4x1x8x128xf32> to vector<1x1x8x128xf32>
      %64 = vector.shape_cast %63 : vector<1x1x8x128xf32> to vector<1x8x128xf32>
      %cst_32 = arith.constant 0.000000e+00 : f32
      %65 = vector.broadcast %cst_32 : f32 to vector<1x8x128xf32>
      %66 = arith.select %62, %64, %65 : vector<1x8x128xi1>, vector<1x8x128xf32>
      %cst_33 = arith.constant dense<0.000000e+00> : vector<8x128xf32>
      %67 = vector.multi_reduction <add>, %66, %cst_33 [0] : vector<1x8x128xf32> to vector<8x128xf32>
      %cst_34 = arith.constant 0.000000e+00 : f32
      %68 = vector.broadcast %cst_34 : f32 to vector<1x8x128xf32>
      %69 = arith.select %32, %64, %68 : vector<1x8x128xi1>, vector<1x8x128xf32>
      %cst_35 = arith.constant dense<0.000000e+00> : vector<8x128xf32>
      %70 = vector.multi_reduction <add>, %69, %cst_35 [0] : vector<1x8x128xf32> to vector<8x128xf32>
      %cst_36 = arith.constant 1.000000e+00 : f32
      %cst_37 = arith.constant 0.000000e+00 : f32
      %71 = vector.broadcast %cst_36 : f32 to vector<1x8x128xf32>
      %72 = vector.broadcast %cst_37 : f32 to vector<1x8x128xf32>
      %73 = arith.select %62, %71, %72 : vector<1x8x128xi1>, vector<1x8x128xf32>
      %cst_38 = arith.constant dense<0.000000e+00> : vector<8x128xf32>
      %74 = vector.multi_reduction <add>, %73, %cst_38 [0] : vector<1x8x128xf32> to vector<8x128xf32>
      %c3_i32 = arith.constant 3 : i32
      %75 = vector.broadcast %c3_i32 : i32 to vector<1x8x128xi32>
      %76 = arith.cmpi eq, %30, %75 : vector<1x8x128xi32>
      %77 = vector.extract_strided_slice %29 {offsets = [3, 0, 0, 0], sizes = [1, 1, 8, 128], strides = [1, 1, 1, 1]} : vector<4x1x8x128xf32> to vector<1x1x8x128xf32>
      %78 = vector.shape_cast %77 : vector<1x1x8x128xf32> to vector<1x8x128xf32>
      %cst_39 = arith.constant 0.000000e+00 : f32
      %79 = vector.broadcast %cst_39 : f32 to vector<1x8x128xf32>
      %80 = arith.select %76, %78, %79 : vector<1x8x128xi1>, vector<1x8x128xf32>
      %cst_40 = arith.constant dense<0.000000e+00> : vector<8x128xf32>
      %81 = vector.multi_reduction <add>, %80, %cst_40 [0] : vector<1x8x128xf32> to vector<8x128xf32>
      %cst_41 = arith.constant 0.000000e+00 : f32
      %82 = vector.broadcast %cst_41 : f32 to vector<1x8x128xf32>
      %83 = arith.select %32, %78, %82 : vector<1x8x128xi1>, vector<1x8x128xf32>
      %cst_42 = arith.constant dense<0.000000e+00> : vector<8x128xf32>
      %84 = vector.multi_reduction <add>, %83, %cst_42 [0] : vector<1x8x128xf32> to vector<8x128xf32>
      %cst_43 = arith.constant 1.000000e+00 : f32
      %cst_44 = arith.constant 0.000000e+00 : f32
      %85 = vector.broadcast %cst_43 : f32 to vector<1x8x128xf32>
      %86 = vector.broadcast %cst_44 : f32 to vector<1x8x128xf32>
      %87 = arith.select %76, %85, %86 : vector<1x8x128xi1>, vector<1x8x128xf32>
      %cst_45 = arith.constant dense<0.000000e+00> : vector<8x128xf32>
      %88 = vector.multi_reduction <add>, %87, %cst_45 [0] : vector<1x8x128xf32> to vector<8x128xf32>
      %89 = vector.shape_cast %39 : vector<8x128xf32> to vector<1x8x128xf32>
      %90 = vector.shape_cast %53 : vector<8x128xf32> to vector<1x8x128xf32>
      %91 = vector.shape_cast %67 : vector<8x128xf32> to vector<1x8x128xf32>
      %92 = vector.shape_cast %81 : vector<8x128xf32> to vector<1x8x128xf32>
      %93 = vector.shape_cast %42 : vector<8x128xf32> to vector<1x8x128xf32>
      %94 = vector.shape_cast %56 : vector<8x128xf32> to vector<1x8x128xf32>
      %95 = vector.shape_cast %70 : vector<8x128xf32> to vector<1x8x128xf32>
      %96 = vector.shape_cast %84 : vector<8x128xf32> to vector<1x8x128xf32>
      %97 = vector.shape_cast %46 : vector<8x128xf32> to vector<1x8x128xf32>
      %98 = vector.shape_cast %60 : vector<8x128xf32> to vector<1x8x128xf32>
      %99 = vector.shape_cast %74 : vector<8x128xf32> to vector<1x8x128xf32>
      %100 = vector.shape_cast %88 : vector<8x128xf32> to vector<1x8x128xf32>
      %101 = tpu.concatenate %89, %90, %91, %92, %93, %94, %95, %96, %97, %98, %99, %100 in 0 : vector<1x8x128xf32>, vector<1x8x128xf32>, vector<1x8x128xf32>, vector<1x8x128xf32>, vector<1x8x128xf32>, vector<1x8x128xf32>, vector<1x8x128xf32>, vector<1x8x128xf32>, vector<1x8x128xf32>, vector<1x8x128xf32>, vector<1x8x128xf32>, vector<1x8x128xf32> -> vector<12x8x128xf32>
      %102 = arith.addf %14, %101 : vector<12x8x128xf32>
      %c0_46 = arith.constant 0 : index
      %c0_47 = arith.constant 0 : index
      %c0_48 = arith.constant 0 : index
      %c0_49 = arith.constant 0 : index
      %103 = vector.load %arg5[%c0_46, %c0_47, %c0_48, %c0_49] : memref<1x12x8x128xf32, #tpu.memory_space<vmem>>, vector<1x12x8x128xf32>
      %104 = vector.shape_cast %103 : vector<1x12x8x128xf32> to vector<12x8x128xf32>
      %105 = vector.shape_cast %102 : vector<12x8x128xf32> to vector<1x12x8x128xf32>
      tpu.vector_store %arg5[%c0_46, %c0_47, %c0_48, %c0_49], %105 {strides = array<i32>} : memref<1x12x8x128xf32, #tpu.memory_space<vmem>>, vector<1x12x8x128xf32>,
    } else {
    }
    return
  }
  func.func @transform_0(%arg0: i32, %arg1: i32, %arg2: i32) -> (i32, i32, i32, i32) {
    %c1_i32 = arith.constant 1 : i32
    %0 = arith.muli %arg1, %c1_i32 : i32
    %1 = arith.addi %0, %arg2 : i32
    %c0_i32 = arith.constant 0 : i32
    %c0_i32_0 = arith.constant 0 : i32
    %c0_i32_1 = arith.constant 0 : i32
    return %arg0, %c0_i32, %1, %c0_i32_0 : i32, i32, i32, i32
  }
  func.func @transform_1(%arg0: i32, %arg1: i32, %arg2: i32) -> (i32, i32, i32) {
    %c1_i32 = arith.constant 1 : i32
    %0 = arith.muli %arg1, %c1_i32 : i32
    %1 = arith.addi %0, %arg2 : i32
    %c0_i32 = arith.constant 0 : i32
    %c0_i32_0 = arith.constant 0 : i32
    return %arg0, %1, %c0_i32 : i32, i32, i32
  }
  func.func @transform_2(%arg0: i32, %arg1: i32, %arg2: i32) -> (i32, i32, i32, i32) {
    %c1_i32 = arith.constant 1 : i32
    %0 = arith.muli %arg0, %c1_i32 : i32
    %1 = arith.addi %0, %arg1 : i32
    %c0_i32 = arith.constant 0 : i32
    %c0_i32_0 = arith.constant 0 : i32
    %c0_i32_1 = arith.constant 0 : i32
    %c0_i32_2 = arith.constant 0 : i32
    return %1, %c0_i32, %c0_i32_0, %c0_i32_1 : i32, i32, i32, i32
  }
}

</mosaic_0001>

<llo_original>
// kernel: tpu_custom_call.1
$region0: #{tpu_custom_call.1}
  #allocation0 [shape = 'u32[]', space=smem, size = 0x4, offset = 0x4, fixed_abs, tag = 'smem constant byte address 0x4 - core index']
  #allocation1 [shape = 'u32[144,128]{1,0:T(1,128)}', space=vmem, size = 0x12000, scoped, tag = 'internal scratch']
  %s0 = inlined_call_operand.hbm [shape: f32[2,4,8,128], index: 0, kind: input, shape index: {}]
  %s1 = inlined_call_operand.hbm [shape: s32[2,8,128], index: 1, kind: input, shape index: {}]
  %s2 = inlined_call_operand.hbm [shape: f32[2,12,8,128], index: 2, kind: output, shape index: {}]
  %s3 = sld [smem:[#allocation0]]
  $region61: #{tpu_custom_call.1} parent=0
    _
  %s5 = ssub.s32 1, %s3
  %s6 = scalar_select 0, %s5, %s3
  $region1: #{tpu_custom_call.1} parent=0
    #allocation2 [shape = 'u8[32768]{0}', space=vmem, size = 0x8000, scoped, tag = 'input window, operand 0']
    #allocation3 [shape = 's32[2]{0}', space=sflag, size = 0x8, scoped, tag = 'scoped memory for tpu_custom_call.1']
    #allocation4 [shape = 's32[2]{0}', space=sflag, size = 0x8, scoped, tag = 'scoped memory for tpu_custom_call.1']
    #allocation5 [shape = 'u8[8192]{0}', space=vmem, size = 0x2000, scoped, tag = 'input window, operand 1']
    #allocation6 [shape = 's32[2]{0}', space=sflag, size = 0x8, scoped, tag = 'scoped memory for tpu_custom_call.1']
    #allocation7 [shape = 'u8[98304]{0}', space=vmem, size = 0x18000, scoped, tag = 'output window, operand 0']
    %7 = vsyncpa [#allocation3], 0
    %s8 = scalar_lea.sflag [#allocation3], 1
    %9 = vsyncpa %s8, 0
    %10 = vsyncpa [#allocation6], 0
    %s11 = scalar_lea.sflag [#allocation6], 1
    %12 = vsyncpa %s11, 0
    %13 = vsyncpa [#allocation4], 0
    %s14 = scalar_lea.sflag [#allocation4], 1
    %15 = vsyncpa %s14, 0
    loop: start=0, step=1, limit=4
    $region2: #{tpu_custom_call.1} parent=1 // loop_pre_header
      _
    $region3: #{tpu_custom_call.1} parent=1 // loop_header
      %s17 = sphi 0, %s21
      %p18 = scmp.ge.s32.totalorder %s17, 4
      %s24 = sphi 0, %s43
      %s25 = sphi 0, %s39
      %s26 = sphi 0, %s35
      %s27 = sphi 0, %s24
      %s28 = sphi 0, %s25
      %s29 = sphi 0, %s26
      %s30 = sphi 0, %s27
      %s31 = sphi 0, %s28
      %s32 = sphi 0, %s29
      %s50 = sphi 0, %s52
      %s53 = sphi 0, %s50
      %s54 = sphi 0, %s53
      %s70 = sphi 0, %s54
      %s80 = sphi 0, %s82
      %s83 = sphi 0, %s80
      %s84 = sphi 0, %s83
      %s100 = sphi 0, %s84
      %s108 = sphi 0, %s110
      %s111 = sphi 0, %s108
      %s112 = sphi 0, %s111
      %s128 = sphi 0, %s112
    $region4: #{tpu_custom_call.1} parent=1 // loop_header_branch
      %20 = sbr.rel (%p18) target = $region8
    $region5: #{tpu_custom_call.1} parent=1 // loop_body
      %s22 = ssub.s32 %s17, 1
      %s23 = ssub.s32 %s17, 2
      %s33 = sadd.s32 1, %s26
      %p34 = scmp.ge.s32.totalorder %s33, 1
      %s35 = scalar_select %p34, 0, %s33
      %s36 = sadd.s32 1, %s25
      %s37 = scalar_select %p34, %s36, %s25
      %p38 = scmp.ge.s32.totalorder %s37, 1
      %s39 = scalar_select %p38, 0, %s37
      %s40 = sadd.s32 1, %s24
      %s41 = scalar_select %p38, %s40, %s24
      %p42 = scmp.ge.s32.totalorder %s41, 2
      %s43 = scalar_select %p42, 0, %s41
      %s44 = sadd.s32 %s25, %s26
      %s45 = sadd.s32 %s39, %s35
      %s46 = ssub.s32 %s24, %s43
      %s47 = ssub.s32 %s44, %s45
      %s48 = sor.u32 %s46, %s47
      %p49 = scmp.eq.s32.totalorder %s48, 0
      %s51 = sadd.s32 %s50, 1
      %s52 = scalar_select %p49, %s50, %s51
      %p55 = pneg %p49
      %p56 = scmp.eq.s32.totalorder %s17, 1
      %p57 = por %p55, %p56
      %p58 = scmp.ne.s32.totalorder %s50, %s53
      %p59 = scmp.eq.s32.totalorder %s17, 0
      %p60 = por %p58, %p59
      %p61 = scmp.ne.s32.totalorder %s50, %s53
      %p62 = scmp.eq.s32.totalorder %s22, 1
      %p63 = por %p61, %p62
      %p64 = scmp.ne.s32.totalorder %s53, %s54
      %p65 = scmp.eq.s32.totalorder %s22, 0
      %p66 = por %p64, %p65
      %p67 = scmp.ne.s32.totalorder %s53, %s54
      %p68 = scmp.eq.s32.totalorder %s23, 1
      %p69 = por %p67, %p68
      %p71 = scmp.ne.s32.totalorder %s54, %s70
      %p72 = scmp.eq.s32.totalorder %s23, 0
      %p73 = por %p71, %p72
      %s74 = sadd.s32 %s25, %s26
      %s75 = sadd.s32 %s39, %s35
      %s76 = ssub.s32 %s24, %s43
      %s77 = ssub.s32 %s74, %s75
      %s78 = sor.u32 %s76, %s77
      %p79 = scmp.eq.s32.totalorder %s78, 0
      %s81 = sadd.s32 %s80, 1
      %s82 = scalar_select %p79, %s80, %s81
      %p85 = pneg %p79
      %p86 = scmp.eq.s32.totalorder %s17, 1
      %p87 = por %p85, %p86
      %p88 = scmp.ne.s32.totalorder %s80, %s83
      %p89 = scmp.eq.s32.totalorder %s17, 0
      %p90 = por %p88, %p89
      %p91 = scmp.ne.s32.totalorder %s80, %s83
      %p92 = scmp.eq.s32.totalorder %s22, 1
      %p93 = por %p91, %p92
      %p94 = scmp.ne.s32.totalorder %s83, %s84
      %p95 = scmp.eq.s32.totalorder %s22, 0
      %p96 = por %p94, %p95
      %p97 = scmp.ne.s32.totalorder %s83, %s84
      %p98 = scmp.eq.s32.totalorder %s23, 1
      %p99 = por %p97, %p98
      %p101 = scmp.ne.s32.totalorder %s84, %s100
      %p102 = scmp.eq.s32.totalorder %s23, 0
      %p103 = por %p101, %p102
      %s104 = sadd.s32 %s24, %s25
      %s105 = sadd.s32 %s43, %s39
      %s106 = ssub.s32 %s104, %s105
      %p107 = scmp.eq.s32.totalorder %s106, 0
      %s109 = sadd.s32 %s108, 1
      %s110 = scalar_select %p107, %s108, %s109
      %p113 = pneg %p107
      %p114 = scmp.eq.s32.totalorder %s17, 1
      %p115 = por %p113, %p114
      %p116 = scmp.ne.s32.totalorder %s108, %s111
      %p117 = scmp.eq.s32.totalorder %s17, 0
      %p118 = por %p116, %p117
      %p119 = scmp.ne.s32.totalorder %s108, %s111
      %p120 = scmp.eq.s32.totalorder %s22, 1
      %p121 = por %p119, %p120
      %p122 = scmp.ne.s32.totalorder %s111, %s112
      %p123 = scmp.eq.s32.totalorder %s22, 0
      %p124 = por %p122, %p123
      %p125 = scmp.ne.s32.totalorder %s111, %s112
      %p126 = scmp.eq.s32.totalorder %s23, 1
      %p127 = por %p125, %p126
      %p129 = scmp.ne.s32.totalorder %s112, %s128
      %p130 = scmp.eq.s32.totalorder %s23, 0
      %p131 = por %p129, %p130
      %p132 = scmp.le.s32.totalorder 1, %s17
      %p133 = scmp.lt.s32.totalorder %s17, 3
      %p134 = pnand %p132, %p133
      %p135 = pneg %p134
      // Predicated region
      $region9: #{tpu_custom_call.1} parent=5 // pred_check
        _
      $region10: #{tpu_custom_call.1} parent=5 // pred_check_branch
        %137 = sbr.rel (%p134) target = $region12
      $region11: #{tpu_custom_call.1} parent=5 // pred_region
        %s138 = ssub.s32 %s17, 1
      $region12: #{tpu_custom_call.1} parent=5 // pred_fallthru
        _
      %p139 = scmp.lt.s32.totalorder %s17, 2
      // Predicated region
      $region13: #{tpu_custom_call.1} parent=5 // pred_check
        %p140 = pneg %p139
      $region14: #{tpu_custom_call.1} parent=5 // pred_check_branch
        %142 = sbr.rel (%p140) target = $region16
      $region15: #{tpu_custom_call.1} parent=5 // pred_region
        // Predicated region
        $region17: #{tpu_custom_call.1} parent=15 // pred_check
          %p143 = pneg %p60
        $region18: #{tpu_custom_call.1} parent=15 // pred_check_branch
          %145 = sbr.rel (%p143) target = $region20
        $region19: #{tpu_custom_call.1} parent=15 // pred_region
          %s146 = sand.u32 %s50, 1
          %s147 = scalar_lea.sflag [#allocation3], %s146
          %s148 = sand.u32 %s50, 1
          %s149 = smul.addr %s148, 32
          %s150 = scalar_lea.vmem [#allocation2], %s149
          %s151 = sadd.s32 %s25, %s26
          %s153 = ssub.s32 512, 512
          %154 = vsyncadd %s147, %s153
          %s155 = smul.addr %s24, 4
          %s156 = sadd.s32 %s151, %s155
          %s157 = smul.addr %s156, 128
          %s158 = scalar_lea.hbm %s0, %s157
          %s159 = sshll.u32 %s150, 4
          %s160 = int_to_ptr.vmem [resolvable:$true] %s159
          %165 = dma.hbm_to_vmem [thread:$0]  %s158, 512, %s160, %s147, 128, 128, 8
        $region20: #{tpu_custom_call.1} parent=15 // pred_fallthru
          _
        // Predicated region
        $region21: #{tpu_custom_call.1} parent=15 // pred_check
          %p166 = pneg %p90
        $region22: #{tpu_custom_call.1} parent=15 // pred_check_branch
          %168 = sbr.rel (%p166) target = $region24
        $region23: #{tpu_custom_call.1} parent=15 // pred_region
          %s169 = sand.u32 %s80, 1
          %s170 = scalar_lea.sflag [#allocation6], %s169
          %s171 = sand.u32 %s80, 1
          %s172 = smul.addr %s171, 8
          %s173 = scalar_lea.vmem [#allocation5], %s172
          %s174 = sadd.s32 %s25, %s26
          %s176 = ssub.s32 128, 128
          %177 = vsyncadd %s170, %s176
          %s178 = sadd.s32 %s174, %s24
          %s179 = smul.addr %s178, 128
          %s180 = scalar_lea.hbm %s1, %s179
          %s182 = sshll.u32 %s173, 4
          %s183 = int_to_ptr.vmem [resolvable:$true] %s182
          %185 = dma.hbm_to_vmem [thread:$0]  %s180, 128, %s183, %s170
        $region24: #{tpu_custom_call.1} parent=15 // pred_fallthru
          _
      $region16: #{tpu_custom_call.1} parent=5 // pred_fallthru
        _
      %p186 = scmp.le.s32.totalorder 1, %s17
      %p187 = scmp.lt.s32.totalorder %s17, 3
      %p188 = pnand %p186, %p187
      %p189 = pneg %p188
      // Predicated region
      $region25: #{tpu_custom_call.1} parent=5 // pred_check
        _
      $region26: #{tpu_custom_call.1} parent=5 // pred_check_branch
        %191 = sbr.rel (%p188) target = $region28
      $region27: #{tpu_custom_call.1} parent=5 // pred_region
        %s192 = ssub.s32 %s17, 1
        %s193 = sand.u32 %s53, 1
        %s194 = scalar_lea.sflag [#allocation3], %s193
        %s195 = sand.u32 %s53, 1
        %s196 = smul.addr %s195, 32
        %s197 = scalar_lea.vmem [#allocation2], %s196
        // Predicated region
        $region29: #{tpu_custom_call.1} parent=27 // pred_check
          %p198 = pneg %p66
        $region30: #{tpu_custom_call.1} parent=27 // pred_check_branch
          %200 = sbr.rel (%p198) target = $region32
        $region31: #{tpu_custom_call.1} parent=27 // pred_region
          %201 = dma.done %s194, 512
        $region32: #{tpu_custom_call.1} parent=27 // pred_fallthru
          _
        %s202 = sand.u32 %s83, 1
        %s203 = scalar_lea.sflag [#allocation6], %s202
        %s204 = sand.u32 %s83, 1
        %s205 = smul.addr %s204, 8
        %s206 = scalar_lea.vmem [#allocation5], %s205
        // Predicated region
        $region33: #{tpu_custom_call.1} parent=27 // pred_check
          %p207 = pneg %p96
        $region34: #{tpu_custom_call.1} parent=27 // pred_check_branch
          %209 = sbr.rel (%p207) target = $region36
        $region35: #{tpu_custom_call.1} parent=27 // pred_region
          %210 = dma.done %s203, 128
        $region36: #{tpu_custom_call.1} parent=27 // pred_fallthru
          _
        %s211 = sand.u32 %s53, 1
        %s212 = scalar_lea.sflag [#allocation3], %s211
        %s213 = sand.u32 %s53, 1
        %s214 = smul.addr %s213, 32
        %s215 = scalar_lea.vmem [#allocation2], %s214
        %p216 = pneg %p66
        %p217 = pneg %p63
        %s218 = sand.u32 %s83, 1
        %s219 = scalar_lea.sflag [#allocation6], %s218
        %s220 = sand.u32 %s83, 1
        %s221 = smul.addr %s220, 8
        %s222 = scalar_lea.vmem [#allocation5], %s221
        %p223 = pneg %p96
        %p224 = pneg %p93
        %p225 = pneg %p124
        %p226 = pneg %p121
        %s227 = sand.u32 %s111, 1
        %s228 = scalar_lea.sflag [#allocation4], %s227
        %s229 = sand.u32 %s111, 1
        %s230 = smul.addr %s229, 96
        %s231 = scalar_lea.vmem [#allocation7], %s230
        %s232 = sadd.s32 %s28, %s29
        %s233 = sadd.s32 %s28, %s29
        %s234 = sadd.s32 %s27, %s28
        %s235 = sadd.s32 %s28, %s29
        %p236 = scmp.eq.s32.totalorder %s29, 0
        // Predicated region
        $region37: #{tpu_custom_call.1} parent=27 // pred_check
          %p237 = pneg %p236
        $region38: #{tpu_custom_call.1} parent=27 // pred_check_branch
          %239 = sbr.rel (%p237) target = $region40
        $region39: #{tpu_custom_call.1} parent=27 // pred_region
          %240 = vst [vmem:[%s231] sm:$0xff] 0.0
          %241 = vst [vmem:[%s231 + $0x8] sm:$0xff] 0.0
          %242 = vst [vmem:[%s231 + $0x10] sm:$0xff] 0.0
          %243 = vst [vmem:[%s231 + $0x18] sm:$0xff] 0.0
          %244 = vst [vmem:[%s231 + $0x20] sm:$0xff] 0.0
          %245 = vst [vmem:[%s231 + $0x28] sm:$0xff] 0.0
          %246 = vst [vmem:[%s231 + $0x30] sm:$0xff] 0.0
          %247 = vst [vmem:[%s231 + $0x38] sm:$0xff] 0.0
          %248 = vst [vmem:[%s231 + $0x40] sm:$0xff] 0.0
          %249 = vst [vmem:[%s231 + $0x48] sm:$0xff] 0.0
          %250 = vst [vmem:[%s231 + $0x50] sm:$0xff] 0.0
          %251 = vst [vmem:[%s231 + $0x58] sm:$0xff] 0.0
        $region40: #{tpu_custom_call.1} parent=27 // pred_fallthru
          _
        %s252 = sadd.s32 %s235, 1
        %s253 = smul.u32 %s252, 8
        %p254 = scmp.gt.s32.totalorder %s253, 2
        %p255 = scmp.le.s32.totalorder %s253, 2
        // Predicated region
        $region41: #{tpu_custom_call.1} parent=27 // pred_check
          %p256 = pneg %p255
        $region42: #{tpu_custom_call.1} parent=27 // pred_check_branch
          %258 = sbr.rel (%p256) target = $region44
        $region43: #{tpu_custom_call.1} parent=27 // pred_region
          %v259 = vld [vmem:[%s231] sm:$0xff]
          %v260 = vld [vmem:[%s231 + $0x8] sm:$0xff]
          %v261 = vld [vmem:[%s231 + $0x10] sm:$0xff]
          %v262 = vld [vmem:[%s231 + $0x18] sm:$0xff]
          %v263 = vld [vmem:[%s231 + $0x20] sm:$0xff]
          %v264 = vld [vmem:[%s231 + $0x28] sm:$0xff]
          %v265 = vld [vmem:[%s231 + $0x30] sm:$0xff]
          %v266 = vld [vmem:[%s231 + $0x38] sm:$0xff]
          %v267 = vld [vmem:[%s231 + $0x40] sm:$0xff]
          %v268 = vld [vmem:[%s231 + $0x48] sm:$0xff]
          %v269 = vld [vmem:[%s231 + $0x50] sm:$0xff]
          %v270 = vld [vmem:[%s231 + $0x58] sm:$0xff]
          %v271 = vld [vmem:[%s197] sm:$0xff]
          %v272 = vld [vmem:[%s197 + $0x8] sm:$0xff]
          %v273 = vld [vmem:[%s197 + $0x10] sm:$0xff]
          %v274 = vld [vmem:[%s197 + $0x18] sm:$0xff]
          %v275 = vld [vmem:[%s206] sm:$0xff]
          %v276 = vmax.f32 %v271, %v272
          %v277 = vmax.f32 %v273, %v274
          %v278 = vmax.f32 %v276, %v277
          %v279 = vsub.f32 %v271, %v278
          %v280 = vsub.f32 %v272, %v278
          %v281 = vsub.f32 %v273, %v278
          %v282 = vsub.f32 %v274, %v278
          %v283 = vmul.f32 %v279, 1.442695
          %v284 = vpow.pop %v283
          %v285 = vmul.f32 %v280, 1.442695
          %v286 = vpow.pop %v285
          %v287 = vmul.f32 %v281, 1.442695
          %v288 = vpow.pop %v287
          %v289 = vmul.f32 %v282, 1.442695
          %v290 = vpow.pop %v289
          %v291 = vadd.f32 %v284, %v286
          %v292 = vadd.f32 %v291, %v288
          %v293 = vadd.f32 %v292, %v290
          %v294 = vrcp.pop %v293
          %v295 = vmul.f32 %v284, %v294
          %v296 = vmul.f32 %v286, %v294
          %v297 = vmul.f32 %v288, %v294
          %v298 = vmul.f32 %v290, %v294
          %vm299 = vcmp.eq.s32.totalorder %v275, 0
          %v300 = vsel %vm299, %v295, 0.0
          %v301 = vadd.f32 %v300, 0.0
          %v302 = vadd.f32 %v295, 0.0
          %v303 = vsel %vm299, 1.0, 0.0
          %v304 = vadd.f32 %v303, 0.0
          %vm305 = vcmp.eq.s32.totalorder %v275, 1
          %v306 = vsel %vm305, %v296, 0.0
          %v307 = vadd.f32 %v306, 0.0
          %v308 = vadd.f32 %v296, 0.0
          %v309 = vsel %vm305, 1.0, 0.0
          %v310 = vadd.f32 %v309, 0.0
          %vm311 = vcmp.eq.s32.totalorder %v275, 2
          %v312 = vsel %vm311, %v297, 0.0
          %v313 = vadd.f32 %v312, 0.0
          %v314 = vadd.f32 %v297, 0.0
          %v315 = vsel %vm311, 1.0, 0.0
          %v316 = vadd.f32 %v315, 0.0
          %vm317 = vcmp.eq.s32.totalorder %v275, 3
          %v318 = vsel %vm317, %v298, 0.0
          %v319 = vadd.f32 %v318, 0.0
          %v320 = vadd.f32 %v298, 0.0
          %v321 = vsel %vm317, 1.0, 0.0
          %v322 = vadd.f32 %v321, 0.0
          %v323 = vadd.f32 %v259, %v301
          %v324 = vadd.f32 %v260, %v307
          %v325 = vadd.f32 %v261, %v313
          %v326 = vadd.f32 %v262, %v319
          %v327 = vadd.f32 %v263, %v302
          %v328 = vadd.f32 %v264, %v308
          %v329 = vadd.f32 %v265, %v314
          %v330 = vadd.f32 %v266, %v320
          %v331 = vadd.f32 %v267, %v304
          %v332 = vadd.f32 %v268, %v310
          %v333 = vadd.f32 %v269, %v316
          %v334 = vadd.f32 %v270, %v322
          %335 = vst [vmem:[%s231] sm:$0xff] %v323
          %336 = vst [vmem:[%s231 + $0x8] sm:$0xff] %v324
          %337 = vst [vmem:[%s231 + $0x10] sm:$0xff] %v325
          %338 = vst [vmem:[%s231 + $0x18] sm:$0xff] %v326
          %339 = vst [vmem:[%s231 + $0x20] sm:$0xff] %v327
          %340 = vst [vmem:[%s231 + $0x28] sm:$0xff] %v328
          %341 = vst [vmem:[%s231 + $0x30] sm:$0xff] %v329
          %342 = vst [vmem:[%s231 + $0x38] sm:$0xff] %v330
          %343 = vst [vmem:[%s231 + $0x40] sm:$0xff] %v331
          %344 = vst [vmem:[%s231 + $0x48] sm:$0xff] %v332
          %345 = vst [vmem:[%s231 + $0x50] sm:$0xff] %v333
          %346 = vst [vmem:[%s231 + $0x58] sm:$0xff] %v334
        $region44: #{tpu_custom_call.1} parent=27 // pred_fallthru
          _
        // Predicated region
        $region45: #{tpu_custom_call.1} parent=27 // pred_check
          %p347 = pneg %p254
        $region46: #{tpu_custom_call.1} parent=27 // pred_check_branch
          %349 = sbr.rel (%p347) target = $region48
        $region47: #{tpu_custom_call.1} parent=27 // pred_region
          %v350 = vld [vmem:[%s231] sm:$0xff]
          %v351 = vld [vmem:[%s231 + $0x8] sm:$0xff]
          %v352 = vld [vmem:[%s231 + $0x10] sm:$0xff]
          %v353 = vld [vmem:[%s231 + $0x18] sm:$0xff]
          %v354 = vld [vmem:[%s231 + $0x20] sm:$0xff]
          %v355 = vld [vmem:[%s231 + $0x28] sm:$0xff]
          %v356 = vld [vmem:[%s231 + $0x30] sm:$0xff]
          %v357 = vld [vmem:[%s231 + $0x38] sm:$0xff]
          %v358 = vld [vmem:[%s231 + $0x40] sm:$0xff]
          %v359 = vld [vmem:[%s231 + $0x48] sm:$0xff]
          %v360 = vld [vmem:[%s231 + $0x50] sm:$0xff]
          %v361 = vld [vmem:[%s231 + $0x58] sm:$0xff]
          %v362 = vld [vmem:[%s197] sm:$0xff]
          %v363 = vld [vmem:[%s197 + $0x8] sm:$0xff]
          %v364 = vld [vmem:[%s197 + $0x10] sm:$0xff]
          %v365 = vld [vmem:[%s197 + $0x18] sm:$0xff]
          %v366 = vld [vmem:[%s206] sm:$0xff]
          %v367 = vmax.f32 %v362, %v363
          %v368 = vmax.f32 %v364, %v365
          %v369 = vmax.f32 %v367, %v368
          %v370 = vsub.f32 %v362, %v369
          %v371 = vsub.f32 %v363, %v369
          %v372 = vsub.f32 %v364, %v369
          %v373 = vsub.f32 %v365, %v369
          %v374 = vmul.f32 %v370, 1.442695
          %v375 = vpow.pop %v374
          %v376 = vmul.f32 %v371, 1.442695
          %v377 = vpow.pop %v376
          %v378 = vmul.f32 %v372, 1.442695
          %v379 = vpow.pop %v378
          %v380 = vmul.f32 %v373, 1.442695
          %v381 = vpow.pop %v380
          %v382 = vadd.f32 %v375, %v377
          %v383 = vadd.f32 %v382, %v379
          %v384 = vadd.f32 %v383, %v381
          %v385 = vrcp.pop %v384
          %v386 = vmul.f32 %v375, %v385
          %v387 = vmul.f32 %v377, %v385
          %v388 = vmul.f32 %v379, %v385
          %v389 = vmul.f32 %v381, %v385
          %vm390 = vcmp.lt.s32.totalorder %v366, 4
          %vm391 = vcmp.eq.s32.totalorder %v366, 0
          %v392 = vsel %vm391, %v386, 0.0
          %v393 = vadd.f32 %v392, 0.0
          %v394 = vsel %vm390, %v386, 0.0
          %v395 = vadd.f32 %v394, 0.0
          %v396 = vsel %vm391, 1.0, 0.0
          %v397 = vadd.f32 %v396, 0.0
          %vm398 = vcmp.eq.s32.totalorder %v366, 1
          %v399 = vsel %vm398, %v387, 0.0
          %v400 = vadd.f32 %v399, 0.0
          %v401 = vsel %vm390, %v387, 0.0
          %v402 = vadd.f32 %v401, 0.0
          %v403 = vsel %vm398, 1.0, 0.0
          %v404 = vadd.f32 %v403, 0.0
          %vm405 = vcmp.eq.s32.totalorder %v366, 2
          %v406 = vsel %vm405, %v388, 0.0
          %v407 = vadd.f32 %v406, 0.0
          %v408 = vsel %vm390, %v388, 0.0
          %v409 = vadd.f32 %v408, 0.0
          %v410 = vsel %vm405, 1.0, 0.0
          %v411 = vadd.f32 %v410, 0.0
          %vm412 = vcmp.eq.s32.totalorder %v366, 3
          %v413 = vsel %vm412, %v389, 0.0
          %v414 = vadd.f32 %v413, 0.0
          %v415 = vsel %vm390, %v389, 0.0
          %v416 = vadd.f32 %v415, 0.0
          %v417 = vsel %vm412, 1.0, 0.0
          %v418 = vadd.f32 %v417, 0.0
          %v419 = vadd.f32 %v350, %v393
          %v420 = vadd.f32 %v351, %v400
          %v421 = vadd.f32 %v352, %v407
          %v422 = vadd.f32 %v353, %v414
          %v423 = vadd.f32 %v354, %v395
          %v424 = vadd.f32 %v355, %v402
          %v425 = vadd.f32 %v356, %v409
          %v426 = vadd.f32 %v357, %v416
          %v427 = vadd.f32 %v358, %v397
          %v428 = vadd.f32 %v359, %v404
          %v429 = vadd.f32 %v360, %v411
          %v430 = vadd.f32 %v361, %v418
          %431 = vst [vmem:[%s231] sm:$0xff] %v419
          %432 = vst [vmem:[%s231 + $0x8] sm:$0xff] %v420
          %433 = vst [vmem:[%s231 + $0x10] sm:$0xff] %v421
          %434 = vst [vmem:[%s231 + $0x18] sm:$0xff] %v422
          %435 = vst [vmem:[%s231 + $0x20] sm:$0xff] %v423
          %436 = vst [vmem:[%s231 + $0x28] sm:$0xff] %v424
          %437 = vst [vmem:[%s231 + $0x30] sm:$0xff] %v425
          %438 = vst [vmem:[%s231 + $0x38] sm:$0xff] %v426
          %439 = vst [vmem:[%s231 + $0x40] sm:$0xff] %v427
          %440 = vst [vmem:[%s231 + $0x48] sm:$0xff] %v428
          %441 = vst [vmem:[%s231 + $0x50] sm:$0xff] %v429
          %442 = vst [vmem:[%s231 + $0x58] sm:$0xff] %v430
        $region48: #{tpu_custom_call.1} parent=27 // pred_fallthru
          _
        %s443 = sand.u32 %s111, 1
        %s444 = scalar_lea.sflag [#allocation4], %s443
        %s445 = sand.u32 %s111, 1
        %s446 = smul.addr %s445, 96
        %s447 = scalar_lea.vmem [#allocation7], %s446
        // Predicated region
        $region49: #{tpu_custom_call.1} parent=27 // pred_check
          %p448 = pneg %p121
        $region50: #{tpu_custom_call.1} parent=27 // pred_check_branch
          %450 = sbr.rel (%p448) target = $region52
        $region51: #{tpu_custom_call.1} parent=27 // pred_region
          %s451 = sadd.s32 %s27, %s28
          %s453 = ssub.s32 1536, 1536
          %454 = vsyncadd %s444, %s453
          %s455 = smul.addr %s451, 12
          %s456 = smul.addr %s455, 128
          %s457 = scalar_lea.hbm %s2, %s456
          %s458 = sshll.u32 %s447, 4
          %s459 = int_to_ptr.vmem [resolvable:$true] %s458
          %464 = dma.vmem_to_hbm [thread:$0]  %s459, 1536, %s457, %s444, 128, 128, 8
        $region52: #{tpu_custom_call.1} parent=27 // pred_fallthru
          _
      $region28: #{tpu_custom_call.1} parent=5 // pred_fallthru
        _
      %p465 = scmp.le.s32.totalorder 2, %s17
      // Predicated region
      $region53: #{tpu_custom_call.1} parent=5 // pred_check
        %p466 = pneg %p465
      $region54: #{tpu_custom_call.1} parent=5 // pred_check_branch
        %468 = sbr.rel (%p466) target = $region56
      $region55: #{tpu_custom_call.1} parent=5 // pred_region
        %s469 = ssub.s32 %s17, 2
        // Predicated region
        $region57: #{tpu_custom_call.1} parent=55 // pred_check
          %p470 = pneg %p127
        $region58: #{tpu_custom_call.1} parent=55 // pred_check_branch
          %472 = sbr.rel (%p470) target = $region60
        $region59: #{tpu_custom_call.1} parent=55 // pred_region
          %s473 = sand.u32 %s112, 1
          %s474 = scalar_lea.sflag [#allocation4], %s473
          %s475 = sand.u32 %s112, 1
          %s476 = smul.addr %s475, 96
          %s477 = scalar_lea.vmem [#allocation7], %s476
          %478 = dma.done %s474, 1536
        $region60: #{tpu_custom_call.1} parent=55 // pred_fallthru
          _
      $region56: #{tpu_custom_call.1} parent=5 // pred_fallthru
        _
    $region6: #{tpu_custom_call.1} parent=1 // loop_footer
      %s21 = sadd.s32 1, %s17
    $region7: #{tpu_custom_call.1} parent=1 // loop_footer_branch
      %16 = sbr.rel target = $region3
    $region8: #{tpu_custom_call.1} parent=1 // loop_exit
      _
    %479 = vsyncpa [#allocation3], 1
    %s480 = scalar_lea.sflag [#allocation3], 1
    %481 = vsyncpa %s480, 1
    %482 = vsyncpa [#allocation6], 1
    %s483 = scalar_lea.sflag [#allocation6], 1
    %484 = vsyncpa %s483, 1
    %485 = vsyncpa [#allocation4], 1
    %s486 = scalar_lea.sflag [#allocation4], 1
    %487 = vsyncpa %s486, 1

</llo_original>
